<compile_context>
chip_gen: v7x
topology: tpu7x:2x2x1
jax: 0.10.0
libtpu: 0.0.40
codegen_flags: <defaults>
</compile_context>

<pallas_src>
import functools

import jax
import jax.numpy as jnp
from jax.experimental import pallas as pl
from jax.experimental.pallas import tpu as pltpu


def _simple_loss_kernel(
    pos_idx_ref, neg_idx_ref,            # scalar-prefetch [B,3] int32 (used by index_maps)
    ph_ref, pt_ref, pr_ref, pri_ref,     # gathered pos rows, each (1, 1, D) in VMEM
    nh_ref, nt_ref, nr_ref, nri_ref,     # gathered neg rows, each (1, 1, D) in VMEM
    loss_ref,                            # (1, 1) f32 output, resident across the grid
    *, inv_b, num_rows):
    i = pl.program_id(0)

    @pl.when(i == 0)
    def _():
        loss_ref[...] = jnp.zeros_like(loss_ref)

    def score(h_ref, t_ref, r_ref, r_inv_ref):
        h = h_ref[0]          # (1, D)
        t = t_ref[0]
        r = r_ref[0]
        r_inv = r_inv_ref[0]
        fwd = jnp.sum(h * r * t, axis=-1, keepdims=True)       # (1, 1)
        inv = jnp.sum(t * r_inv * h, axis=-1, keepdims=True)   # (1, 1)
        return 0.5 * (fwd + inv)

    pos = score(ph_ref, pt_ref, pr_ref, pri_ref)
    neg = score(nh_ref, nt_ref, nr_ref, nri_ref)

    # MarginRankingLoss-style term: relu(1 - pos + neg); accumulate the sum.
    loss_ref[...] += jnp.maximum(0.0, 1.0 - pos + neg)

    @pl.when(i == num_rows - 1)
    def _():
        loss_ref[...] = loss_ref[...] * inv_b   # finalize: mean over the batch


def simple_forward(entity_head_emb, entity_tail_emb, relation_emb,
                   relation_inv_emb, pos_triplets, neg_triplets):
    """SimplE.forward: mean(relu(1 - score(pos) + score(neg)))."""
    B = pos_triplets.shape[0]
    D = entity_head_emb.shape[1]

    # Add a unit middle axis so each gathered row is a (1, 1, D) block whose
    # last-two dims exactly equal the array's last-two dims (layout-safe for
    # any D / table size; the reshape is metadata-only).
    eh = entity_head_emb[:, None, :]
    et = entity_tail_emb[:, None, :]
    rl = relation_emb[:, None, :]
    rli = relation_inv_emb[:, None, :]

    row = (1, 1, D)
    in_specs = [
        pl.BlockSpec(row, lambda i, p, n: (p[i, 0], 0, 0)),  # pos head  -> entity_head table
        pl.BlockSpec(row, lambda i, p, n: (p[i, 2], 0, 0)),  # pos tail  -> entity_tail table
        pl.BlockSpec(row, lambda i, p, n: (p[i, 1], 0, 0)),  # pos rel   -> relation table
        pl.BlockSpec(row, lambda i, p, n: (p[i, 1], 0, 0)),  # pos rel   -> relation_inv table
        pl.BlockSpec(row, lambda i, p, n: (n[i, 0], 0, 0)),  # neg head
        pl.BlockSpec(row, lambda i, p, n: (n[i, 2], 0, 0)),  # neg tail
        pl.BlockSpec(row, lambda i, p, n: (n[i, 1], 0, 0)),  # neg rel
        pl.BlockSpec(row, lambda i, p, n: (n[i, 1], 0, 0)),  # neg rel_inv
    ]

    kernel = functools.partial(_simple_loss_kernel, inv_b=1.0 / B, num_rows=B)

    loss = pl.pallas_call(
        kernel,
        out_shape=jax.ShapeDtypeStruct((1, 1), jnp.float32),
        grid_spec=pltpu.PrefetchScalarGridSpec(
            num_scalar_prefetch=2,
            grid=(B,),
            in_specs=in_specs,
            out_specs=pl.BlockSpec((1, 1), lambda i, p, n: (0, 0)),
        ),
        compiler_params=pltpu.CompilerParams(
            dimension_semantics=("arbitrary",)),  # output is revisited (accumulator)
    )(pos_triplets, neg_triplets, eh, et, rl, rli, eh, et, rl, rli)
    return loss[0, 0]


def _reference_forward(entity_head_emb, entity_tail_emb, relation_emb,
                       relation_inv_emb, pos_triplets, neg_triplets):
    def score(trip):
        h = entity_head_emb[trip[:, 0]]
        t = entity_tail_emb[trip[:, 2]]
        r = relation_emb[trip[:, 1]]
        r_inv = relation_inv_emb[trip[:, 1]]
        fwd = jnp.sum(h * r * t, axis=1)
        inv = jnp.sum(t * r_inv * h, axis=1)
        return (fwd + inv) / 2.0

    pos = score(pos_triplets)
    neg = score(neg_triplets)
    return jnp.mean(jnp.maximum(0.0, 1.0 - pos + neg))


if __name__ == "__main__":
    num_entities = 32
    num_relations = 8
    embedding_dim = 32
    batch = 8

    key = jax.random.PRNGKey(0)
    k_eh, k_et, k_r, k_ri, k_pos, k_neg = jax.random.split(key, 6)

    bound = 6.0 / (embedding_dim ** 0.5)   # nn.init.uniform_(-6/sqrt(d), 6/sqrt(d))
    entity_head_emb = jax.random.uniform(
        k_eh, (num_entities, embedding_dim), jnp.float32, -bound, bound)
    entity_tail_emb = jax.random.uniform(
        k_et, (num_entities, embedding_dim), jnp.float32, -bound, bound)
    relation_emb = jax.random.uniform(
        k_r, (num_relations, embedding_dim), jnp.float32, -bound, bound)
    relation_inv_emb = jax.random.uniform(
        k_ri, (num_relations, embedding_dim), jnp.float32, -bound, bound)

    def make_triplets(k):
        kh, kr, kt = jax.random.split(k, 3)
        heads = jax.random.randint(kh, (batch,), 0, num_entities)
        rels = jax.random.randint(kr, (batch,), 0, num_relations)
        tails = jax.random.randint(kt, (batch,), 0, num_entities)
        return jnp.stack([heads, rels, tails], axis=1).astype(jnp.int32)

    pos_triplets = make_triplets(k_pos)
    neg_triplets = make_triplets(k_neg)

    loss = simple_forward(entity_head_emb, entity_tail_emb, relation_emb,
                          relation_inv_emb, pos_triplets, neg_triplets)
    jax.block_until_ready(loss)

    ref = _reference_forward(entity_head_emb, entity_tail_emb, relation_emb,
                             relation_inv_emb, pos_triplets, neg_triplets)
    assert jnp.allclose(loss, ref, atol=1e-5, rtol=1e-5), (loss, ref)

    print("KERNEL_OK")
</pallas_src>

<mosaic_0001>
module attributes {stable_mosaic.version = 11 : i64} {
  func.func @_simple_loss_kernel(%arg0: i32, %arg1: memref<8x3xi32, #tpu.memory_space<smem>>, %arg2: memref<8x3xi32, #tpu.memory_space<smem>>, %arg3: memref<1x1x32xf32, #tpu.memory_space<vmem>>, %arg4: memref<1x1x32xf32, #tpu.memory_space<vmem>>, %arg5: memref<1x1x32xf32, #tpu.memory_space<vmem>>, %arg6: memref<1x1x32xf32, #tpu.memory_space<vmem>>, %arg7: memref<1x1x32xf32, #tpu.memory_space<vmem>>, %arg8: memref<1x1x32xf32, #tpu.memory_space<vmem>>, %arg9: memref<1x1x32xf32, #tpu.memory_space<vmem>>, %arg10: memref<1x1x32xf32, #tpu.memory_space<vmem>>, %arg11: memref<1x1xf32, #tpu.memory_space<vmem>>) attributes {dimension_semantics = [#tpu.dimension_semantics<arbitrary>], iteration_bounds = array<i64: 8>, scalar_prefetch = 2 : i64, scratch_operands = 0 : i64, tpu.core_type = #tpu.core_type<tc>, window_params = [{transform_indices = @transform_0, window_bounds = array<i64: 1, 1, 32>}, {transform_indices = @transform_1, window_bounds = array<i64: 1, 1, 32>}, {transform_indices = @transform_2, window_bounds = array<i64: 1, 1, 32>}, {transform_indices = @transform_3, window_bounds = array<i64: 1, 1, 32>}, {transform_indices = @transform_4, window_bounds = array<i64: 1, 1, 32>}, {transform_indices = @transform_5, window_bounds = array<i64: 1, 1, 32>}, {transform_indices = @transform_6, window_bounds = array<i64: 1, 1, 32>}, {transform_indices = @transform_7, window_bounds = array<i64: 1, 1, 32>}, {pipeline_mode = #tpu.pipeline_mode<synchronous>, transform_indices = @transform_8, window_bounds = array<i64: 1, 1>}]} {
    %c0_i32 = arith.constant 0 : i32
    %0 = arith.cmpi eq, %arg0, %c0_i32 : i32
    %1 = arith.extui %0 : i1 to i32
    %c0_i32_0 = arith.constant 0 : i32
    %2 = arith.cmpi ne, %1, %c0_i32_0 : i32
    scf.if %2 {
      %cst_36 = arith.constant 0.000000e+00 : f32
      %52 = vector.broadcast %cst_36 : f32 to vector<1x1xf32>
      %c0_37 = arith.constant 0 : index
      %c0_38 = arith.constant 0 : index
      %53 = vector.load %arg11[%c0_37, %c0_38] : memref<1x1xf32, #tpu.memory_space<vmem>>, vector<1x1xf32>
      tpu.vector_store %arg11[%c0_37, %c0_38], %52 {strides = array<i32>} : memref<1x1xf32, #tpu.memory_space<vmem>>, vector<1x1xf32>,
    } else {
    }
    %c0 = arith.constant 0 : index
    %c0_1 = arith.constant 0 : index
    %c0_2 = arith.constant 0 : index
    %3 = vector.load %arg3[%c0, %c0_1, %c0_2] : memref<1x1x32xf32, #tpu.memory_space<vmem>>, vector<1x1x32xf32>
    %4 = vector.shape_cast %3 : vector<1x1x32xf32> to vector<1x32xf32>
    %c0_3 = arith.constant 0 : index
    %c0_4 = arith.constant 0 : index
    %c0_5 = arith.constant 0 : index
    %5 = vector.load %arg4[%c0_3, %c0_4, %c0_5] : memref<1x1x32xf32, #tpu.memory_space<vmem>>, vector<1x1x32xf32>
    %6 = vector.shape_cast %5 : vector<1x1x32xf32> to vector<1x32xf32>
    %c0_6 = arith.constant 0 : index
    %c0_7 = arith.constant 0 : index
    %c0_8 = arith.constant 0 : index
    %7 = vector.load %arg5[%c0_6, %c0_7, %c0_8] : memref<1x1x32xf32, #tpu.memory_space<vmem>>, vector<1x1x32xf32>
    %8 = vector.shape_cast %7 : vector<1x1x32xf32> to vector<1x32xf32>
    %c0_9 = arith.constant 0 : index
    %c0_10 = arith.constant 0 : index
    %c0_11 = arith.constant 0 : index
    %9 = vector.load %arg6[%c0_9, %c0_10, %c0_11] : memref<1x1x32xf32, #tpu.memory_space<vmem>>, vector<1x1x32xf32>
    %10 = vector.shape_cast %9 : vector<1x1x32xf32> to vector<1x32xf32>
    %11 = arith.mulf %4, %8 : vector<1x32xf32>
    %12 = arith.mulf %11, %6 : vector<1x32xf32>
    %cst = arith.constant dense<0.000000e+00> : vector<1xf32>
    %13 = vector.multi_reduction <add>, %12, %cst [1] : vector<1x32xf32> to vector<1xf32>
    %14 = vector.shape_cast %13 : vector<1xf32> to vector<1x1xf32>
    %15 = arith.mulf %6, %10 : vector<1x32xf32>
    %16 = arith.mulf %15, %4 : vector<1x32xf32>
    %cst_12 = arith.constant dense<0.000000e+00> : vector<1xf32>
    %17 = vector.multi_reduction <add>, %16, %cst_12 [1] : vector<1x32xf32> to vector<1xf32>
    %18 = vector.shape_cast %17 : vector<1xf32> to vector<1x1xf32>
    %19 = arith.addf %14, %18 : vector<1x1xf32>
    %cst_13 = arith.constant 5.000000e-01 : f32
    %20 = vector.broadcast %cst_13 : f32 to vector<1x1xf32>
    %21 = arith.mulf %20, %19 : vector<1x1xf32>
    %c0_14 = arith.constant 0 : index
    %c0_15 = arith.constant 0 : index
    %c0_16 = arith.constant 0 : index
    %22 = vector.load %arg7[%c0_14, %c0_15, %c0_16] : memref<1x1x32xf32, #tpu.memory_space<vmem>>, vector<1x1x32xf32>
    %23 = vector.shape_cast %22 : vector<1x1x32xf32> to vector<1x32xf32>
    %c0_17 = arith.constant 0 : index
    %c0_18 = arith.constant 0 : index
    %c0_19 = arith.constant 0 : index
    %24 = vector.load %arg8[%c0_17, %c0_18, %c0_19] : memref<1x1x32xf32, #tpu.memory_space<vmem>>, vector<1x1x32xf32>
    %25 = vector.shape_cast %24 : vector<1x1x32xf32> to vector<1x32xf32>
    %c0_20 = arith.constant 0 : index
    %c0_21 = arith.constant 0 : index
    %c0_22 = arith.constant 0 : index
    %26 = vector.load %arg9[%c0_20, %c0_21, %c0_22] : memref<1x1x32xf32, #tpu.memory_space<vmem>>, vector<1x1x32xf32>
    %27 = vector.shape_cast %26 : vector<1x1x32xf32> to vector<1x32xf32>
    %c0_23 = arith.constant 0 : index
    %c0_24 = arith.constant 0 : index
    %c0_25 = arith.constant 0 : index
    %28 = vector.load %arg10[%c0_23, %c0_24, %c0_25] : memref<1x1x32xf32, #tpu.memory_space<vmem>>, vector<1x1x32xf32>
    %29 = vector.shape_cast %28 : vector<1x1x32xf32> to vector<1x32xf32>
    %30 = arith.mulf %23, %27 : vector<1x32xf32>
    %31 = arith.mulf %30, %25 : vector<1x32xf32>
    %cst_26 = arith.constant dense<0.000000e+00> : vector<1xf32>
    %32 = vector.multi_reduction <add>, %31, %cst_26 [1] : vector<1x32xf32> to vector<1xf32>
    %33 = vector.shape_cast %32 : vector<1xf32> to vector<1x1xf32>
    %34 = arith.mulf %25, %29 : vector<1x32xf32>
    %35 = arith.mulf %34, %23 : vector<1x32xf32>
    %cst_27 = arith.constant dense<0.000000e+00> : vector<1xf32>
    %36 = vector.multi_reduction <add>, %35, %cst_27 [1] : vector<1x32xf32> to vector<1xf32>
    %37 = vector.shape_cast %36 : vector<1xf32> to vector<1x1xf32>
    %38 = arith.addf %33, %37 : vector<1x1xf32>
    %cst_28 = arith.constant 5.000000e-01 : f32
    %39 = vector.broadcast %cst_28 : f32 to vector<1x1xf32>
    %40 = arith.mulf %39, %38 : vector<1x1xf32>
    %c0_29 = arith.constant 0 : index
    %c0_30 = arith.constant 0 : index
    %41 = vector.load %arg11[%c0_29, %c0_30] : memref<1x1xf32, #tpu.memory_space<vmem>>, vector<1x1xf32>
    %cst_31 = arith.constant 1.000000e+00 : f32
    %42 = vector.broadcast %cst_31 : f32 to vector<1x1xf32>
    %43 = arith.subf %42, %21 : vector<1x1xf32>
    %44 = arith.addf %43, %40 : vector<1x1xf32>
    %cst_32 = arith.constant 0.000000e+00 : f32
    %45 = vector.broadcast %cst_32 : f32 to vector<1x1xf32>
    %46 = arith.maximumf %45, %44 : vector<1x1xf32>
    %47 = arith.addf %41, %46 : vector<1x1xf32>
    %c0_33 = arith.constant 0 : index
    %c0_34 = arith.constant 0 : index
    %48 = vector.load %arg11[%c0_33, %c0_34] : memref<1x1xf32, #tpu.memory_space<vmem>>, vector<1x1xf32>
    tpu.vector_store %arg11[%c0_33, %c0_34], %47 {strides = array<i32>} : memref<1x1xf32, #tpu.memory_space<vmem>>, vector<1x1xf32>,
    %c7_i32 = arith.constant 7 : i32
    %49 = arith.cmpi eq, %arg0, %c7_i32 : i32
    %50 = arith.extui %49 : i1 to i32
    %c0_i32_35 = arith.constant 0 : i32
    %51 = arith.cmpi ne, %50, %c0_i32_35 : i32
    scf.if %51 {
      %c0_36 = arith.constant 0 : index
      %c0_37 = arith.constant 0 : index
      %52 = vector.load %arg11[%c0_36, %c0_37] : memref<1x1xf32, #tpu.memory_space<vmem>>, vector<1x1xf32>
      %cst_38 = arith.constant 1.250000e-01 : f32
      %53 = vector.broadcast %cst_38 : f32 to vector<1x1xf32>
      %54 = arith.mulf %52, %53 : vector<1x1xf32>
      %c0_39 = arith.constant 0 : index
      %c0_40 = arith.constant 0 : index
      %55 = vector.load %arg11[%c0_39, %c0_40] : memref<1x1xf32, #tpu.memory_space<vmem>>, vector<1x1xf32>
      tpu.vector_store %arg11[%c0_39, %c0_40], %54 {strides = array<i32>} : memref<1x1xf32, #tpu.memory_space<vmem>>, vector<1x1xf32>,
    } else {
    }
    return
  }
  func.func @transform_0(%arg0: i32, %arg1: memref<8x3xi32, #tpu.memory_space<smem>>, %arg2: memref<8x3xi32, #tpu.memory_space<smem>>) -> (i32, i32, i32) {
    %0 = arith.index_cast %arg0 : i32 to index
    %c0 = arith.constant 0 : index
    %1 = memref.load %arg1[%0, %c0] : memref<8x3xi32, #tpu.memory_space<smem>>
    %c0_i32 = arith.constant 0 : i32
    %c0_i32_0 = arith.constant 0 : i32
    %c0_i32_1 = arith.constant 0 : i32
    return %1, %c0_i32, %c0_i32_0 : i32, i32, i32
  }
  func.func @transform_1(%arg0: i32, %arg1: memref<8x3xi32, #tpu.memory_space<smem>>, %arg2: memref<8x3xi32, #tpu.memory_space<smem>>) -> (i32, i32, i32) {
    %0 = arith.index_cast %arg0 : i32 to index
    %c2 = arith.constant 2 : index
    %1 = memref.load %arg1[%0, %c2] : memref<8x3xi32, #tpu.memory_space<smem>>
    %c0_i32 = arith.constant 0 : i32
    %c0_i32_0 = arith.constant 0 : i32
    %c0_i32_1 = arith.constant 0 : i32
    return %1, %c0_i32, %c0_i32_0 : i32, i32, i32
  }
  func.func @transform_2(%arg0: i32, %arg1: memref<8x3xi32, #tpu.memory_space<smem>>, %arg2: memref<8x3xi32, #tpu.memory_space<smem>>) -> (i32, i32, i32) {
    %0 = arith.index_cast %arg0 : i32 to index
    %c1 = arith.constant 1 : index
    %1 = memref.load %arg1[%0, %c1] : memref<8x3xi32, #tpu.memory_space<smem>>
    %c0_i32 = arith.constant 0 : i32
    %c0_i32_0 = arith.constant 0 : i32
    %c0_i32_1 = arith.constant 0 : i32
    return %1, %c0_i32, %c0_i32_0 : i32, i32, i32
  }
  func.func @transform_3(%arg0: i32, %arg1: memref<8x3xi32, #tpu.memory_space<smem>>, %arg2: memref<8x3xi32, #tpu.memory_space<smem>>) -> (i32, i32, i32) {
    %0 = arith.index_cast %arg0 : i32 to index
    %c1 = arith.constant 1 : index
    %1 = memref.load %arg1[%0, %c1] : memref<8x3xi32, #tpu.memory_space<smem>>
    %c0_i32 = arith.constant 0 : i32
    %c0_i32_0 = arith.constant 0 : i32
    %c0_i32_1 = arith.constant 0 : i32
    return %1, %c0_i32, %c0_i32_0 : i32, i32, i32
  }
  func.func @transform_4(%arg0: i32, %arg1: memref<8x3xi32, #tpu.memory_space<smem>>, %arg2: memref<8x3xi32, #tpu.memory_space<smem>>) -> (i32, i32, i32) {
    %0 = arith.index_cast %arg0 : i32 to index
    %c0 = arith.constant 0 : index
    %1 = memref.load %arg2[%0, %c0] : memref<8x3xi32, #tpu.memory_space<smem>>
    %c0_i32 = arith.constant 0 : i32
    %c0_i32_0 = arith.constant 0 : i32
    %c0_i32_1 = arith.constant 0 : i32
    return %1, %c0_i32, %c0_i32_0 : i32, i32, i32
  }
  func.func @transform_5(%arg0: i32, %arg1: memref<8x3xi32, #tpu.memory_space<smem>>, %arg2: memref<8x3xi32, #tpu.memory_space<smem>>) -> (i32, i32, i32) {
    %0 = arith.index_cast %arg0 : i32 to index
    %c2 = arith.constant 2 : index
    %1 = memref.load %arg2[%0, %c2] : memref<8x3xi32, #tpu.memory_space<smem>>
    %c0_i32 = arith.constant 0 : i32
    %c0_i32_0 = arith.constant 0 : i32
    %c0_i32_1 = arith.constant 0 : i32
    return %1, %c0_i32, %c0_i32_0 : i32, i32, i32
  }
  func.func @transform_6(%arg0: i32, %arg1: memref<8x3xi32, #tpu.memory_space<smem>>, %arg2: memref<8x3xi32, #tpu.memory_space<smem>>) -> (i32, i32, i32) {
    %0 = arith.index_cast %arg0 : i32 to index
    %c1 = arith.constant 1 : index
    %1 = memref.load %arg2[%0, %c1] : memref<8x3xi32, #tpu.memory_space<smem>>
    %c0_i32 = arith.constant 0 : i32
    %c0_i32_0 = arith.constant 0 : i32
    %c0_i32_1 = arith.constant 0 : i32
    return %1, %c0_i32, %c0_i32_0 : i32, i32, i32
  }
  func.func @transform_7(%arg0: i32, %arg1: memref<8x3xi32, #tpu.memory_space<smem>>, %arg2: memref<8x3xi32, #tpu.memory_space<smem>>) -> (i32, i32, i32) {
    %0 = arith.index_cast %arg0 : i32 to index
    %c1 = arith.constant 1 : index
    %1 = memref.load %arg2[%0, %c1] : memref<8x3xi32, #tpu.memory_space<smem>>
    %c0_i32 = arith.constant 0 : i32
    %c0_i32_0 = arith.constant 0 : i32
    %c0_i32_1 = arith.constant 0 : i32
    return %1, %c0_i32, %c0_i32_0 : i32, i32, i32
  }
  func.func @transform_8(%arg0: i32, %arg1: memref<8x3xi32, #tpu.memory_space<smem>>, %arg2: memref<8x3xi32, #tpu.memory_space<smem>>) -> (i32, i32) {
    %c0_i32 = arith.constant 0 : i32
    %c0_i32_0 = arith.constant 0 : i32
    %c0_i32_1 = arith.constant 0 : i32
    return %c0_i32, %c0_i32_0 : i32, i32
  }
}

</mosaic_0001>

<llo_original>
// kernel: tpu_custom_call.1
$region0: #{tpu_custom_call.1}
  #allocation0 [shape = 'u32[]', space=smem, size = 0x4, offset = 0x4, fixed_abs, tag = 'smem constant byte address 0x4 - core index']
  #allocation1 [shape = 'u32[144,128]{1,0:T(1,128)}', space=vmem, size = 0x12000, scoped, tag = 'internal scratch']
  #allocation2 [shape = 's32[1]{0}', space=sflag, size = 0x4, scoped, tag = 'scoped memory for tpu_custom_call.1']
  #allocation3 [shape = 'u8[4096]{0}', space=smem, size = 0x1000, scoped, tag = 'prefetched SMEM operand 0']
  #allocation4 [shape = 'u8[4096]{0}', space=smem, size = 0x1000, scoped, tag = 'prefetched SMEM operand 1']
  %s0 = inlined_call_operand.vmem [shape: s32[8,3], index: 0, kind: input, shape index: {}]
  %s1 = inlined_call_operand.vmem [shape: s32[8,3], index: 1, kind: input, shape index: {}]
  %s2 = inlined_call_operand.hbm [shape: f32[32,1,32], index: 2, kind: input, shape index: {}]
  %s3 = inlined_call_operand.vmem [shape: f32[32,1,32], index: 3, kind: input, shape index: {}]
  %s4 = inlined_call_operand.hbm [shape: f32[8,1,32], index: 4, kind: input, shape index: {}]
  %s5 = inlined_call_operand.vmem [shape: f32[8,1,32], index: 5, kind: input, shape index: {}]
  %s6 = inlined_call_operand.hbm [shape: f32[32,1,32], index: 6, kind: input, shape index: {}]
  %s7 = inlined_call_operand.hbm [shape: f32[32,1,32], index: 7, kind: input, shape index: {}]
  %s8 = inlined_call_operand.vmem [shape: f32[8,1,32], index: 8, kind: input, shape index: {}]
  %s9 = inlined_call_operand.vmem [shape: f32[8,1,32], index: 9, kind: input, shape index: {}]
  %s10 = inlined_call_operand.hbm [shape: f32[1,1], index: 10, kind: output, shape index: {}]
  %s11 = sld [smem:[#allocation0]]
  $region89: #{tpu_custom_call.1} parent=0
    _
  %s13 = ssub.s32 1, %s11
  %s14 = scalar_select 0, %s13, %s11
  %s15 = sshll.u32 %s0, 4
  %s16 = int_to_ptr.vmem [resolvable:$true] %s15
  %18 = dma.vmem_to_smem %s16, 128, [#allocation3], [#allocation2]
  %s19 = sshll.u32 %s1, 4
  %s20 = int_to_ptr.vmem [resolvable:$true] %s19
  %22 = dma.vmem_to_smem %s20, 128, [#allocation4], [#allocation2]
  %23 = dma.done [#allocation2], 256
  %24 = sfence
  $region1: #{tpu_custom_call.1} parent=0
    #allocation5 [shape = 'u8[1024]{0}', space=vmem, size = 0x400, scoped, tag = 'input window, operand 2']
    #allocation6 [shape = 's32[2]{0}', space=sflag, size = 0x8, scoped, tag = 'scoped memory for tpu_custom_call.1']
    #allocation7 [shape = 's32[2]{0}', space=sflag, size = 0x8, scoped, tag = 'scoped memory for tpu_custom_call.1']
    #allocation8 [shape = 'u8[1024]{0}', space=vmem, size = 0x400, scoped, tag = 'input window, operand 4']
    #allocation9 [shape = 's32[2]{0}', space=sflag, size = 0x8, scoped, tag = 'scoped memory for tpu_custom_call.1']
    #allocation10 [shape = 'u8[1024]{0}', space=vmem, size = 0x400, scoped, tag = 'input window, operand 6']
    #allocation11 [shape = 'u8[1024]{0}', space=vmem, size = 0x400, scoped, tag = 'input window, operand 7']
    #allocation12 [shape = 's32[2]{0}', space=sflag, size = 0x8, scoped, tag = 'scoped memory for tpu_custom_call.1']
    #allocation13 [shape = 'u8[512]{0}', space=vmem, size = 0x400, scoped, tag = 'output window, operand 0, single buffered']
    %25 = vsyncpa [#allocation6], 0
    %s26 = scalar_lea.sflag [#allocation6], 1
    %27 = vsyncpa %s26, 0
    %28 = vsyncpa [#allocation9], 0
    %s29 = scalar_lea.sflag [#allocation9], 1
    %30 = vsyncpa %s29, 0
    %31 = vsyncpa [#allocation12], 0
    %s32 = scalar_lea.sflag [#allocation12], 1
    %33 = vsyncpa %s32, 0
    %34 = vsyncpa [#allocation7], 0
    loop: start=0, step=1, limit=10
    $region2: #{tpu_custom_call.1} parent=1 // loop_pre_header
      _
    $region3: #{tpu_custom_call.1} parent=1 // loop_header
      %s36 = sphi 0, %s40
      %p37 = scmp.ge.s32.totalorder %s36, 10
      %s50 = sphi 0, %s52
      %s53 = sphi 0, %s50
      %s54 = sphi 0, %s53
      %s70 = sphi 0, %s54
      %s82 = sphi 0, %s84
      %s85 = sphi 0, %s82
      %s86 = sphi 0, %s85
      %s102 = sphi 0, %s86
      %s114 = sphi 0, %s116
      %s117 = sphi 0, %s114
      %s118 = sphi 0, %s117
      %s134 = sphi 0, %s118
      %s146 = sphi 0, %s148
      %s149 = sphi 0, %s146
      %s150 = sphi 0, %s149
      %s166 = sphi 0, %s150
      %s176 = sphi 0, %s178
      %s179 = sphi 0, %s176
      %s180 = sphi 0, %s179
      %s196 = sphi 0, %s180
      %s208 = sphi 0, %s210
      %s211 = sphi 0, %s208
      %s212 = sphi 0, %s211
      %s228 = sphi 0, %s212
      %s240 = sphi 0, %s242
      %s243 = sphi 0, %s240
      %s244 = sphi 0, %s243
      %s260 = sphi 0, %s244
      %s272 = sphi 0, %s274
      %s275 = sphi 0, %s272
      %s276 = sphi 0, %s275
      %s292 = sphi 0, %s276
      %s296 = sphi 0, %s296
      %s298 = sphi 0, %s296
      %s299 = sphi 0, %s298
      %s313 = sphi 0, %s299
    $region4: #{tpu_custom_call.1} parent=1 // loop_header_branch
      %39 = sbr.rel (%p37) target = $region8
    $region5: #{tpu_custom_call.1} parent=1 // loop_body
      %s41 = ssub.s32 %s36, 1
      %s42 = ssub.s32 %s36, 2
      %s43 = sadd.s32 %s36, 1
      %s44 = smul.u32 %s36, 128
      %s45 = sld [smem:[#allocation3 + %s44]]
      %s46 = smul.u32 %s43, 128
      %s47 = sld [smem:[#allocation3 + %s46]]
      %s48 = ssub.s32 %s45, %s47
      %p49 = scmp.eq.s32.totalorder %s48, 0
      %s51 = sadd.s32 %s50, 1
      %s52 = scalar_select %p49, %s50, %s51
      %p55 = pneg %p49
      %p56 = scmp.eq.s32.totalorder %s36, 7
      %p57 = por %p55, %p56
      %p58 = scmp.ne.s32.totalorder %s50, %s53
      %p59 = scmp.eq.s32.totalorder %s36, 0
      %p60 = por %p58, %p59
      %p61 = scmp.ne.s32.totalorder %s50, %s53
      %p62 = scmp.eq.s32.totalorder %s41, 7
      %p63 = por %p61, %p62
      %p64 = scmp.ne.s32.totalorder %s53, %s54
      %p65 = scmp.eq.s32.totalorder %s41, 0
      %p66 = por %p64, %p65
      %p67 = scmp.ne.s32.totalorder %s53, %s54
      %p68 = scmp.eq.s32.totalorder %s42, 7
      %p69 = por %p67, %p68
      %p71 = scmp.ne.s32.totalorder %s54, %s70
      %p72 = scmp.eq.s32.totalorder %s42, 0
      %p73 = por %p71, %p72
      %s74 = smul.u32 %s36, 128
      %s75 = sadd.s32 %s74, 2
      %s76 = sld [smem:[#allocation3 + %s75]]
      %s77 = smul.u32 %s43, 128
      %s78 = sadd.s32 %s77, 2
      %s79 = sld [smem:[#allocation3 + %s78]]
      %s80 = ssub.s32 %s76, %s79
      %p81 = scmp.eq.s32.totalorder %s80, 0
      %s83 = sadd.s32 %s82, 1
      %s84 = scalar_select %p81, %s82, %s83
      %p87 = pneg %p81
      %p88 = scmp.eq.s32.totalorder %s36, 7
      %p89 = por %p87, %p88
      %p90 = scmp.ne.s32.totalorder %s82, %s85
      %p91 = scmp.eq.s32.totalorder %s36, 0
      %p92 = por %p90, %p91
      %p93 = scmp.ne.s32.totalorder %s82, %s85
      %p94 = scmp.eq.s32.totalorder %s41, 7
      %p95 = por %p93, %p94
      %p96 = scmp.ne.s32.totalorder %s85, %s86
      %p97 = scmp.eq.s32.totalorder %s41, 0
      %p98 = por %p96, %p97
      %p99 = scmp.ne.s32.totalorder %s85, %s86
      %p100 = scmp.eq.s32.totalorder %s42, 7
      %p101 = por %p99, %p100
      %p103 = scmp.ne.s32.totalorder %s86, %s102
      %p104 = scmp.eq.s32.totalorder %s42, 0
      %p105 = por %p103, %p104
      %s106 = smul.u32 %s36, 128
      %s107 = sadd.s32 %s106, 1
      %s108 = sld [smem:[#allocation3 + %s107]]
      %s109 = smul.u32 %s43, 128
      %s110 = sadd.s32 %s109, 1
      %s111 = sld [smem:[#allocation3 + %s110]]
      %s112 = ssub.s32 %s108, %s111
      %p113 = scmp.eq.s32.totalorder %s112, 0
      %s115 = sadd.s32 %s114, 1
      %s116 = scalar_select %p113, %s114, %s115
      %p119 = pneg %p113
      %p120 = scmp.eq.s32.totalorder %s36, 7
      %p121 = por %p119, %p120
      %p122 = scmp.ne.s32.totalorder %s114, %s117
      %p123 = scmp.eq.s32.totalorder %s36, 0
      %p124 = por %p122, %p123
      %p125 = scmp.ne.s32.totalorder %s114, %s117
      %p126 = scmp.eq.s32.totalorder %s41, 7
      %p127 = por %p125, %p126
      %p128 = scmp.ne.s32.totalorder %s117, %s118
      %p129 = scmp.eq.s32.totalorder %s41, 0
      %p130 = por %p128, %p129
      %p131 = scmp.ne.s32.totalorder %s117, %s118
      %p132 = scmp.eq.s32.totalorder %s42, 7
      %p133 = por %p131, %p132
      %p135 = scmp.ne.s32.totalorder %s118, %s134
      %p136 = scmp.eq.s32.totalorder %s42, 0
      %p137 = por %p135, %p136
      %s138 = smul.u32 %s36, 128
      %s139 = sadd.s32 %s138, 1
      %s140 = sld [smem:[#allocation3 + %s139]]
      %s141 = smul.u32 %s43, 128
      %s142 = sadd.s32 %s141, 1
      %s143 = sld [smem:[#allocation3 + %s142]]
      %s144 = ssub.s32 %s140, %s143
      %p145 = scmp.eq.s32.totalorder %s144, 0
      %s147 = sadd.s32 %s146, 1
      %s148 = scalar_select %p145, %s146, %s147
      %p151 = pneg %p145
      %p152 = scmp.eq.s32.totalorder %s36, 7
      %p153 = por %p151, %p152
      %p154 = scmp.ne.s32.totalorder %s146, %s149
      %p155 = scmp.eq.s32.totalorder %s36, 0
      %p156 = por %p154, %p155
      %p157 = scmp.ne.s32.totalorder %s146, %s149
      %p158 = scmp.eq.s32.totalorder %s41, 7
      %p159 = por %p157, %p158
      %p160 = scmp.ne.s32.totalorder %s149, %s150
      %p161 = scmp.eq.s32.totalorder %s41, 0
      %p162 = por %p160, %p161
      %p163 = scmp.ne.s32.totalorder %s149, %s150
      %p164 = scmp.eq.s32.totalorder %s42, 7
      %p165 = por %p163, %p164
      %p167 = scmp.ne.s32.totalorder %s150, %s166
      %p168 = scmp.eq.s32.totalorder %s42, 0
      %p169 = por %p167, %p168
      %s170 = smul.u32 %s36, 128
      %s171 = sld [smem:[#allocation4 + %s170]]
      %s172 = smul.u32 %s43, 128
      %s173 = sld [smem:[#allocation4 + %s172]]
      %s174 = ssub.s32 %s171, %s173
      %p175 = scmp.eq.s32.totalorder %s174, 0
      %s177 = sadd.s32 %s176, 1
      %s178 = scalar_select %p175, %s176, %s177
      %p181 = pneg %p175
      %p182 = scmp.eq.s32.totalorder %s36, 7
      %p183 = por %p181, %p182
      %p184 = scmp.ne.s32.totalorder %s176, %s179
      %p185 = scmp.eq.s32.totalorder %s36, 0
      %p186 = por %p184, %p185
      %p187 = scmp.ne.s32.totalorder %s176, %s179
      %p188 = scmp.eq.s32.totalorder %s41, 7
      %p189 = por %p187, %p188
      %p190 = scmp.ne.s32.totalorder %s179, %s180
      %p191 = scmp.eq.s32.totalorder %s41, 0
      %p192 = por %p190, %p191
      %p193 = scmp.ne.s32.totalorder %s179, %s180
      %p194 = scmp.eq.s32.totalorder %s42, 7
      %p195 = por %p193, %p194
      %p197 = scmp.ne.s32.totalorder %s180, %s196
      %p198 = scmp.eq.s32.totalorder %s42, 0
      %p199 = por %p197, %p198
      %s200 = smul.u32 %s36, 128
      %s201 = sadd.s32 %s200, 2
      %s202 = sld [smem:[#allocation4 + %s201]]
      %s203 = smul.u32 %s43, 128
      %s204 = sadd.s32 %s203, 2
      %s205 = sld [smem:[#allocation4 + %s204]]
      %s206 = ssub.s32 %s202, %s205
      %p207 = scmp.eq.s32.totalorder %s206, 0
      %s209 = sadd.s32 %s208, 1
      %s210 = scalar_select %p207, %s208, %s209
      %p213 = pneg %p207
      %p214 = scmp.eq.s32.totalorder %s36, 7
      %p215 = por %p213, %p214
      %p216 = scmp.ne.s32.totalorder %s208, %s211
      %p217 = scmp.eq.s32.totalorder %s36, 0
      %p218 = por %p216, %p217
      %p219 = scmp.ne.s32.totalorder %s208, %s211
      %p220 = scmp.eq.s32.totalorder %s41, 7
      %p221 = por %p219, %p220
      %p222 = scmp.ne.s32.totalorder %s211, %s212
      %p223 = scmp.eq.s32.totalorder %s41, 0
      %p224 = por %p222, %p223
      %p225 = scmp.ne.s32.totalorder %s211, %s212
      %p226 = scmp.eq.s32.totalorder %s42, 7
      %p227 = por %p225, %p226
      %p229 = scmp.ne.s32.totalorder %s212, %s228
      %p230 = scmp.eq.s32.totalorder %s42, 0
      %p231 = por %p229, %p230
      %s232 = smul.u32 %s36, 128
      %s233 = sadd.s32 %s232, 1
      %s234 = sld [smem:[#allocation4 + %s233]]
      %s235 = smul.u32 %s43, 128
      %s236 = sadd.s32 %s235, 1
      %s237 = sld [smem:[#allocation4 + %s236]]
      %s238 = ssub.s32 %s234, %s237
      %p239 = scmp.eq.s32.totalorder %s238, 0
      %s241 = sadd.s32 %s240, 1
      %s242 = scalar_select %p239, %s240, %s241
      %p245 = pneg %p239
      %p246 = scmp.eq.s32.totalorder %s36, 7
      %p247 = por %p245, %p246
      %p248 = scmp.ne.s32.totalorder %s240, %s243
      %p249 = scmp.eq.s32.totalorder %s36, 0
      %p250 = por %p248, %p249
      %p251 = scmp.ne.s32.totalorder %s240, %s243
      %p252 = scmp.eq.s32.totalorder %s41, 7
      %p253 = por %p251, %p252
      %p254 = scmp.ne.s32.totalorder %s243, %s244
      %p255 = scmp.eq.s32.totalorder %s41, 0
      %p256 = por %p254, %p255
      %p257 = scmp.ne.s32.totalorder %s243, %s244
      %p258 = scmp.eq.s32.totalorder %s42, 7
      %p259 = por %p257, %p258
      %p261 = scmp.ne.s32.totalorder %s244, %s260
      %p262 = scmp.eq.s32.totalorder %s42, 0
      %p263 = por %p261, %p262
      %s264 = smul.u32 %s36, 128
      %s265 = sadd.s32 %s264, 1
      %s266 = sld [smem:[#allocation4 + %s265]]
      %s267 = smul.u32 %s43, 128
      %s268 = sadd.s32 %s267, 1
      %s269 = sld [smem:[#allocation4 + %s268]]
      %s270 = ssub.s32 %s266, %s269
      %p271 = scmp.eq.s32.totalorder %s270, 0
      %s273 = sadd.s32 %s272, 1
      %s274 = scalar_select %p271, %s272, %s273
      %p277 = pneg %p271
      %p278 = scmp.eq.s32.totalorder %s36, 7
      %p279 = por %p277, %p278
      %p280 = scmp.ne.s32.totalorder %s272, %s275
      %p281 = scmp.eq.s32.totalorder %s36, 0
      %p282 = por %p280, %p281
      %p283 = scmp.ne.s32.totalorder %s272, %s275
      %p284 = scmp.eq.s32.totalorder %s41, 7
      %p285 = por %p283, %p284
      %p286 = scmp.ne.s32.totalorder %s275, %s276
      %p287 = scmp.eq.s32.totalorder %s41, 0
      %p288 = por %p286, %p287
      %p289 = scmp.ne.s32.totalorder %s275, %s276
      %p290 = scmp.eq.s32.totalorder %s42, 7
      %p291 = por %p289, %p290
      %p293 = scmp.ne.s32.totalorder %s276, %s292
      %p294 = scmp.eq.s32.totalorder %s42, 0
      %p295 = por %p293, %p294
      %s297 = sadd.s32 %s296, 1
      %p300 = scmp.eq.s32.totalorder %s36, 7
      %p301 = scmp.ne.s32.totalorder %s296, %s298
      %p302 = scmp.eq.s32.totalorder %s36, 0
      %p303 = por %p301, %p302
      %p304 = scmp.ne.s32.totalorder %s296, %s298
      %p305 = scmp.eq.s32.totalorder %s41, 7
      %p306 = por %p304, %p305
      %p307 = scmp.ne.s32.totalorder %s298, %s299
      %p308 = scmp.eq.s32.totalorder %s41, 0
      %p309 = por %p307, %p308
      %p310 = scmp.ne.s32.totalorder %s298, %s299
      %p311 = scmp.eq.s32.totalorder %s42, 7
      %p312 = por %p310, %p311
      %p314 = scmp.ne.s32.totalorder %s299, %s313
      %p315 = scmp.eq.s32.totalorder %s42, 0
      %p316 = por %p314, %p315
      %p317 = scmp.le.s32.totalorder 1, %s36
      %p318 = scmp.lt.s32.totalorder %s36, 9
      %p319 = pnand %p317, %p318
      %p320 = pneg %p319
      // Predicated region
      $region9: #{tpu_custom_call.1} parent=5 // pred_check
        _
      $region10: #{tpu_custom_call.1} parent=5 // pred_check_branch
        %322 = sbr.rel (%p319) target = $region12
      $region11: #{tpu_custom_call.1} parent=5 // pred_region
        %s323 = ssub.s32 %s36, 1
      $region12: #{tpu_custom_call.1} parent=5 // pred_fallthru
        _
      %p324 = scmp.lt.s32.totalorder %s36, 8
      // Predicated region
      $region13: #{tpu_custom_call.1} parent=5 // pred_check
        %p325 = pneg %p324
      $region14: #{tpu_custom_call.1} parent=5 // pred_check_branch
        %327 = sbr.rel (%p325) target = $region16
      $region15: #{tpu_custom_call.1} parent=5 // pred_region
        // Predicated region
        $region17: #{tpu_custom_call.1} parent=15 // pred_check
          %p328 = pneg %p60
        $region18: #{tpu_custom_call.1} parent=15 // pred_check_branch
          %330 = sbr.rel (%p328) target = $region20
        $region19: #{tpu_custom_call.1} parent=15 // pred_region
          %s331 = sand.u32 %s50, 1
          %s332 = scalar_lea.sflag [#allocation6], %s331
          %s333 = sand.u32 %s50, 1
          %s334 = scalar_lea.vmem [#allocation5], %s333
          %s335 = smul.u32 %s36, 128
          %s336 = sld [smem:[#allocation3 + %s335]]
          %s338 = ssub.s32 16, 16
          %339 = vsyncadd %s332, %s338
          %s340 = smul.addr %s336, 16
          %s341 = scalar_lea.hbm %s2, %s340
          %s343 = sshll.u32 %s334, 4
          %s344 = int_to_ptr.vmem [resolvable:$true] %s343
          %346 = dma.hbm_to_vmem [thread:$0]  %s341, 16, %s344, %s332
        $region20: #{tpu_custom_call.1} parent=15 // pred_fallthru
          _
        // Predicated region
        $region21: #{tpu_custom_call.1} parent=15 // pred_check
          %p347 = pneg %p92
        $region22: #{tpu_custom_call.1} parent=15 // pred_check_branch
          %349 = sbr.rel (%p347) target = $region24
        $region23: #{tpu_custom_call.1} parent=15 // pred_region
          %s350 = smul.u32 %s36, 128
          %s351 = sadd.s32 %s350, 2
          %s352 = sld [smem:[#allocation3 + %s351]]
          %p353 = scmp.lt.s32.totalorder %s352, 31
          %s354 = scalar_select %p353, %s352, 31
          %s355 = scalar_lea.vmem %s3, %s354
          %s356 = smul.u32 %s36, 128
          %s357 = sadd.s32 %s356, 2
          %s358 = sld [smem:[#allocation3 + %s357]]
        $region24: #{tpu_custom_call.1} parent=15 // pred_fallthru
          _
        // Predicated region
        $region25: #{tpu_custom_call.1} parent=15 // pred_check
          %p359 = pneg %p124
        $region26: #{tpu_custom_call.1} parent=15 // pred_check_branch
          %361 = sbr.rel (%p359) target = $region28
        $region27: #{tpu_custom_call.1} parent=15 // pred_region
          %s362 = sand.u32 %s36, 1
          %s363 = scalar_lea.sflag [#allocation9], %s362
          %s364 = sand.u32 %s114, 1
          %s365 = scalar_lea.vmem [#allocation8], %s364
          %s366 = smul.u32 %s36, 128
          %s367 = sadd.s32 %s366, 1
          %s368 = sld [smem:[#allocation3 + %s367]]
          %s370 = ssub.s32 16, 16
          %371 = vsyncadd %s363, %s370
          %s372 = smul.addr %s368, 16
          %s373 = scalar_lea.hbm %s4, %s372
          %s375 = sshll.u32 %s365, 4
          %s376 = int_to_ptr.vmem [resolvable:$true] %s375
          %378 = dma.hbm_to_vmem [thread:$0]  %s373, 16, %s376, %s363
        $region28: #{tpu_custom_call.1} parent=15 // pred_fallthru
          _
        // Predicated region
        $region29: #{tpu_custom_call.1} parent=15 // pred_check
          %p379 = pneg %p156
        $region30: #{tpu_custom_call.1} parent=15 // pred_check_branch
          %381 = sbr.rel (%p379) target = $region32
        $region31: #{tpu_custom_call.1} parent=15 // pred_region
          %s382 = smul.u32 %s36, 128
          %s383 = sadd.s32 %s382, 1
          %s384 = sld [smem:[#allocation3 + %s383]]
          %p385 = scmp.lt.s32.totalorder %s384, 7
          %s386 = scalar_select %p385, %s384, 7
          %s387 = scalar_lea.vmem %s5, %s386
          %s388 = smul.u32 %s36, 128
          %s389 = sadd.s32 %s388, 1
          %s390 = sld [smem:[#allocation3 + %s389]]
        $region32: #{tpu_custom_call.1} parent=15 // pred_fallthru
          _
        // Predicated region
        $region33: #{tpu_custom_call.1} parent=15 // pred_check
          %p391 = pneg %p186
        $region34: #{tpu_custom_call.1} parent=15 // pred_check_branch
          %393 = sbr.rel (%p391) target = $region36
        $region35: #{tpu_custom_call.1} parent=15 // pred_region
          %s394 = sand.u32 %s36, 1
          %s395 = scalar_lea.sflag [#allocation9], %s394
          %s396 = sand.u32 %s176, 1
          %s397 = scalar_lea.vmem [#allocation10], %s396
          %s398 = smul.u32 %s36, 128
          %s399 = sld [smem:[#allocation4 + %s398]]
          %s401 = ssub.s32 16, 16
          %402 = vsyncadd %s395, %s401
          %s403 = smul.addr %s399, 16
          %s404 = scalar_lea.hbm %s6, %s403
          %s406 = sshll.u32 %s397, 4
          %s407 = int_to_ptr.vmem [resolvable:$true] %s406
          %409 = dma.hbm_to_vmem [thread:$0]  %s404, 16, %s407, %s395
        $region36: #{tpu_custom_call.1} parent=15 // pred_fallthru
          _
        // Predicated region
        $region37: #{tpu_custom_call.1} parent=15 // pred_check
          %p410 = pneg %p218
        $region38: #{tpu_custom_call.1} parent=15 // pred_check_branch
          %412 = sbr.rel (%p410) target = $region40
        $region39: #{tpu_custom_call.1} parent=15 // pred_region
          %s413 = sand.u32 %s208, 1
          %s414 = scalar_lea.sflag [#allocation12], %s413
          %s415 = sand.u32 %s208, 1
          %s416 = scalar_lea.vmem [#allocation11], %s415
          %s417 = smul.u32 %s36, 128
          %s418 = sadd.s32 %s417, 2
          %s419 = sld [smem:[#allocation4 + %s418]]
          %s421 = ssub.s32 16, 16
          %422 = vsyncadd %s414, %s421
          %s423 = smul.addr %s419, 16
          %s424 = scalar_lea.hbm %s7, %s423
          %s426 = sshll.u32 %s416, 4
          %s427 = int_to_ptr.vmem [resolvable:$true] %s426
          %429 = dma.hbm_to_vmem [thread:$0]  %s424, 16, %s427, %s414
        $region40: #{tpu_custom_call.1} parent=15 // pred_fallthru
          _
        // Predicated region
        $region41: #{tpu_custom_call.1} parent=15 // pred_check
          %p430 = pneg %p250
        $region42: #{tpu_custom_call.1} parent=15 // pred_check_branch
          %432 = sbr.rel (%p430) target = $region44
        $region43: #{tpu_custom_call.1} parent=15 // pred_region
          %s433 = smul.u32 %s36, 128
          %s434 = sadd.s32 %s433, 1
          %s435 = sld [smem:[#allocation4 + %s434]]
          %p436 = scmp.lt.s32.totalorder %s435, 7
          %s437 = scalar_select %p436, %s435, 7
          %s438 = scalar_lea.vmem %s8, %s437
          %s439 = smul.u32 %s36, 128
          %s440 = sadd.s32 %s439, 1
          %s441 = sld [smem:[#allocation4 + %s440]]
        $region44: #{tpu_custom_call.1} parent=15 // pred_fallthru
          _
        // Predicated region
        $region45: #{tpu_custom_call.1} parent=15 // pred_check
          %p442 = pneg %p282
        $region46: #{tpu_custom_call.1} parent=15 // pred_check_branch
          %444 = sbr.rel (%p442) target = $region48
        $region47: #{tpu_custom_call.1} parent=15 // pred_region
          %s445 = smul.u32 %s36, 128
          %s446 = sadd.s32 %s445, 1
          %s447 = sld [smem:[#allocation4 + %s446]]
          %p448 = scmp.lt.s32.totalorder %s447, 7
          %s449 = scalar_select %p448, %s447, 7
          %s450 = scalar_lea.vmem %s9, %s449
          %s451 = smul.u32 %s36, 128
          %s452 = sadd.s32 %s451, 1
          %s453 = sld [smem:[#allocation4 + %s452]]
        $region48: #{tpu_custom_call.1} parent=15 // pred_fallthru
          _
      $region16: #{tpu_custom_call.1} parent=5 // pred_fallthru
        _
      %p454 = scmp.le.s32.totalorder 1, %s36
      %p455 = scmp.lt.s32.totalorder %s36, 9
      %p456 = pnand %p454, %p455
      %p457 = pneg %p456
      // Predicated region
      $region49: #{tpu_custom_call.1} parent=5 // pred_check
        _
      $region50: #{tpu_custom_call.1} parent=5 // pred_check_branch
        %459 = sbr.rel (%p456) target = $region52
      $region51: #{tpu_custom_call.1} parent=5 // pred_region
        %s460 = ssub.s32 %s36, 1
        %s461 = sand.u32 %s53, 1
        %s462 = scalar_lea.sflag [#allocation6], %s461
        %s463 = sand.u32 %s53, 1
        %s464 = scalar_lea.vmem [#allocation5], %s463
        // Predicated region
        $region53: #{tpu_custom_call.1} parent=51 // pred_check
          %p465 = pneg %p66
        $region54: #{tpu_custom_call.1} parent=51 // pred_check_branch
          %467 = sbr.rel (%p465) target = $region56
        $region55: #{tpu_custom_call.1} parent=51 // pred_region
          %468 = dma.done %s462, 16
        $region56: #{tpu_custom_call.1} parent=51 // pred_fallthru
          _
        %s469 = sand.u32 %s41, 1
        %s470 = scalar_lea.sflag [#allocation9], %s469
        %s471 = sand.u32 %s117, 1
        %s472 = scalar_lea.vmem [#allocation8], %s471
        // Predicated region
        $region57: #{tpu_custom_call.1} parent=51 // pred_check
          %p473 = pneg %p130
        $region58: #{tpu_custom_call.1} parent=51 // pred_check_branch
          %475 = sbr.rel (%p473) target = $region60
        $region59: #{tpu_custom_call.1} parent=51 // pred_region
          %476 = dma.done %s470, 16
        $region60: #{tpu_custom_call.1} parent=51 // pred_fallthru
          _
        %s477 = sand.u32 %s41, 1
        %s478 = scalar_lea.sflag [#allocation9], %s477
        %s479 = sand.u32 %s179, 1
        %s480 = scalar_lea.vmem [#allocation10], %s479
        // Predicated region
        $region61: #{tpu_custom_call.1} parent=51 // pred_check
          %p481 = pneg %p192
        $region62: #{tpu_custom_call.1} parent=51 // pred_check_branch
          %483 = sbr.rel (%p481) target = $region64
        $region63: #{tpu_custom_call.1} parent=51 // pred_region
          %484 = dma.done %s478, 16
        $region64: #{tpu_custom_call.1} parent=51 // pred_fallthru
          _
        %s485 = sand.u32 %s211, 1
        %s486 = scalar_lea.sflag [#allocation12], %s485
        %s487 = sand.u32 %s211, 1
        %s488 = scalar_lea.vmem [#allocation11], %s487
        // Predicated region
        $region65: #{tpu_custom_call.1} parent=51 // pred_check
          %p489 = pneg %p224
        $region66: #{tpu_custom_call.1} parent=51 // pred_check_branch
          %491 = sbr.rel (%p489) target = $region68
        $region67: #{tpu_custom_call.1} parent=51 // pred_region
          %492 = dma.done %s486, 16
        $region68: #{tpu_custom_call.1} parent=51 // pred_fallthru
          _
        %s493 = sand.u32 %s53, 1
        %s494 = scalar_lea.sflag [#allocation6], %s493
        %s495 = sand.u32 %s53, 1
        %s496 = scalar_lea.vmem [#allocation5], %s495
        %p497 = pneg %p66
        %p498 = pneg %p63
        %s499 = smul.u32 %s41, 128
        %s500 = sadd.s32 %s499, 2
        %s501 = sld [smem:[#allocation3 + %s500]]
        %p502 = scmp.lt.s32.totalorder %s501, 31
        %s503 = scalar_select %p502, %s501, 31
        %s504 = scalar_lea.vmem %s3, %s503
        %p505 = pneg %p98
        %p506 = pneg %p95
        %s507 = sand.u32 %s41, 1
        %s508 = scalar_lea.sflag [#allocation9], %s507
        %s509 = sand.u32 %s117, 1
        %s510 = scalar_lea.vmem [#allocation8], %s509
        %p511 = pneg %p130
        %p512 = pneg %p127
        %s513 = smul.u32 %s41, 128
        %s514 = sadd.s32 %s513, 1
        %s515 = sld [smem:[#allocation3 + %s514]]
        %p516 = scmp.lt.s32.totalorder %s515, 7
        %s517 = scalar_select %p516, %s515, 7
        %s518 = scalar_lea.vmem %s5, %s517
        %p519 = pneg %p162
        %p520 = pneg %p159
        %s521 = sand.u32 %s41, 1
        %s522 = scalar_lea.sflag [#allocation9], %s521
        %s523 = sand.u32 %s179, 1
        %s524 = scalar_lea.vmem [#allocation10], %s523
        %p525 = pneg %p192
        %p526 = pneg %p189
        %s527 = sand.u32 %s211, 1
        %s528 = scalar_lea.sflag [#allocation12], %s527
        %s529 = sand.u32 %s211, 1
        %s530 = scalar_lea.vmem [#allocation11], %s529
        %p531 = pneg %p224
        %p532 = pneg %p221
        %s533 = smul.u32 %s41, 128
        %s534 = sadd.s32 %s533, 1
        %s535 = sld [smem:[#allocation4 + %s534]]
        %p536 = scmp.lt.s32.totalorder %s535, 7
        %s537 = scalar_select %p536, %s535, 7
        %s538 = scalar_lea.vmem %s8, %s537
        %p539 = pneg %p256
        %p540 = pneg %p253
        %s541 = smul.u32 %s41, 128
        %s542 = sadd.s32 %s541, 1
        %s543 = sld [smem:[#allocation4 + %s542]]
        %p544 = scmp.lt.s32.totalorder %s543, 7
        %s545 = scalar_select %p544, %s543, 7
        %s546 = scalar_lea.vmem %s9, %s545
        %p547 = pneg %p288
        %p548 = pneg %p285
        %p549 = pneg %p309
        %p550 = pneg %p306
        %s551 = smul.u32 %s41, 128
        %s552 = sld [smem:[#allocation3 + %s551]]
        %s553 = smul.u32 %s41, 128
        %s554 = sadd.s32 %s553, 2
        %s555 = sld [smem:[#allocation3 + %s554]]
        %p556 = scmp.lt.s32.totalorder %s555, 31
        %s557 = scalar_select %p556, %s555, 31
        %s558 = scalar_lea.vmem %s3, %s557
        %s559 = smul.u32 %s41, 128
        %s560 = sadd.s32 %s559, 2
        %s561 = sld [smem:[#allocation3 + %s560]]
        %s562 = smul.u32 %s41, 128
        %s563 = sadd.s32 %s562, 1
        %s564 = sld [smem:[#allocation3 + %s563]]
        %s565 = smul.u32 %s41, 128
        %s566 = sadd.s32 %s565, 1
        %s567 = sld [smem:[#allocation3 + %s566]]
        %p568 = scmp.lt.s32.totalorder %s567, 7
        %s569 = scalar_select %p568, %s567, 7
        %s570 = scalar_lea.vmem %s5, %s569
        %s571 = smul.u32 %s41, 128
        %s572 = sadd.s32 %s571, 1
        %s573 = sld [smem:[#allocation3 + %s572]]
        %s574 = smul.u32 %s41, 128
        %s575 = sld [smem:[#allocation4 + %s574]]
        %s576 = smul.u32 %s41, 128
        %s577 = sadd.s32 %s576, 2
        %s578 = sld [smem:[#allocation4 + %s577]]
        %s579 = smul.u32 %s41, 128
        %s580 = sadd.s32 %s579, 1
        %s581 = sld [smem:[#allocation4 + %s580]]
        %p582 = scmp.lt.s32.totalorder %s581, 7
        %s583 = scalar_select %p582, %s581, 7
        %s584 = scalar_lea.vmem %s8, %s583
        %s585 = smul.u32 %s41, 128
        %s586 = sadd.s32 %s585, 1
        %s587 = sld [smem:[#allocation4 + %s586]]
        %s588 = smul.u32 %s41, 128
        %s589 = sadd.s32 %s588, 1
        %s590 = sld [smem:[#allocation4 + %s589]]
        %p591 = scmp.lt.s32.totalorder %s590, 7
        %s592 = scalar_select %p591, %s590, 7
        %s593 = scalar_lea.vmem %s9, %s592
        %s594 = smul.u32 %s41, 128
        %s595 = sadd.s32 %s594, 1
        %s596 = sld [smem:[#allocation4 + %s595]]
        %p597 = scmp.eq.s32.totalorder %s41, 0
        // Predicated region
        $region69: #{tpu_custom_call.1} parent=51 // pred_check
          %p598 = pneg %p597
        $region70: #{tpu_custom_call.1} parent=51 // pred_check_branch
          %600 = sbr.rel (%p598) target = $region72
        $region71: #{tpu_custom_call.1} parent=51 // pred_region
          %vm601 = vcmask 0
          %602 = vst.msk [vmem:[#allocation13] sm:$0x1] %vm601, 0.0
        $region72: #{tpu_custom_call.1} parent=51 // pred_fallthru
          _
        %v603 = vld [vmem:[%s464] sm:$0x1]
        %v604 = vld [vmem:[%s558] sm:$0x1]
        %v605 = vld [vmem:[%s472] sm:$0x1]
        %v606 = vld [vmem:[%s570] sm:$0x1]
        %v607 = vmul.f32 %v603, %v605
        %v608 = vmul.f32 %v607, %v604
        %vm609 = vcmask 253952
        %v610 = vsel %vm609, %v608, 0.0
        %611 = vadd.xlane.f32.xlu0 %v610
        %v612 = vpop.xlane.xlu0 %611
        %v613 = vmul.f32 %v604, %v606
        %v614 = vmul.f32 %v613, %v603
        %v615 = vsel %vm609, %v614, 0.0
        %616 = vadd.xlane.f32.xlu0 %v615
        %v617 = vpop.xlane.xlu0 %616
        %v618 = vadd.f32 %v612, %v617
        %v619 = vmul.f32 %v618, 0.5
        %v620 = vld [vmem:[%s480] sm:$0x1]
        %v621 = vld [vmem:[%s488] sm:$0x1]
        %v622 = vld [vmem:[%s584] sm:$0x1]
        %v623 = vld [vmem:[%s593] sm:$0x1]
        %v624 = vmul.f32 %v620, %v622
        %v625 = vmul.f32 %v624, %v621
        %v626 = vsel %vm609, %v625, 0.0
        %627 = vadd.xlane.f32.xlu0 %v626
        %v628 = vpop.xlane.xlu0 %627
        %v629 = vmul.f32 %v621, %v623
        %v630 = vmul.f32 %v629, %v620
        %v631 = vsel %vm609, %v630, 0.0
        %632 = vadd.xlane.f32.xlu0 %v631
        %v633 = vpop.xlane.xlu0 %632
        %v634 = vadd.f32 %v628, %v633
        %v635 = vmul.f32 %v634, 0.5
        %v636 = vld [vmem:[#allocation13] sm:$0x1]
        %v637 = vsub.f32 1.0, %v619
        %v638 = vadd.f32 %v637, %v635
        %v639 = vmax.f32 %v638, 0.0
        %v640 = vadd.f32 %v636, %v639
        %vm641 = vcmask 0
        %642 = vst.msk [vmem:[#allocation13] sm:$0x1] %vm641, %v640
        %p643 = scmp.eq.s32.totalorder %s41, 7
        // Predicated region
        $region73: #{tpu_custom_call.1} parent=51 // pred_check
          %p644 = pneg %p643
        $region74: #{tpu_custom_call.1} parent=51 // pred_check_branch
          %646 = sbr.rel (%p644) target = $region76
        $region75: #{tpu_custom_call.1} parent=51 // pred_region
          %v647 = vld [vmem:[#allocation13] sm:$0x1]
          %v648 = vmul.f32 %v647, 0.125
          %649 = vst.msk [vmem:[#allocation13] sm:$0x1] %vm641, %v648
        $region76: #{tpu_custom_call.1} parent=51 // pred_fallthru
          _
        // Predicated region
        $region77: #{tpu_custom_call.1} parent=51 // pred_check
          %p650 = pneg %p306
        $region78: #{tpu_custom_call.1} parent=51 // pred_check_branch
          %652 = sbr.rel (%p650) target = $region80
        $region79: #{tpu_custom_call.1} parent=51 // pred_region
          %s654 = ssub.s32 16, 16
          %655 = vsyncadd [#allocation7], %s654
          %s657 = sshll.u32 [#allocation13], 4
          %s658 = int_to_ptr.vmem [resolvable:$true] %s657
          %660 = dma.vmem_to_hbm [thread:$0]  %s658, 16, %s10, [#allocation7]
        $region80: #{tpu_custom_call.1} parent=51 // pred_fallthru
          _
        // Predicated region
        $region81: #{tpu_custom_call.1} parent=51 // pred_check
          %p661 = pneg %p306
        $region82: #{tpu_custom_call.1} parent=51 // pred_check_branch
          %663 = sbr.rel (%p661) target = $region84
        $region83: #{tpu_custom_call.1} parent=51 // pred_region
          %664 = dma.done [#allocation7], 16
        $region84: #{tpu_custom_call.1} parent=51 // pred_fallthru
          _
      $region52: #{tpu_custom_call.1} parent=5 // pred_fallthru
        _
      %p665 = scmp.le.s32.totalorder 2, %s36
      // Predicated region
      $region85: #{tpu_custom_call.1} parent=5 // pred_check
        %p666 = pneg %p665
      $region86: #{tpu_custom_call.1} parent=5 // pred_check_branch
        %668 = sbr.rel (%p666) target = $region88
      $region87: #{tpu_custom_call.1} parent=5 // pred_region
        %s669 = ssub.s32 %s36, 2
      $region88: #{tpu_custom_call.1} parent=5 // pred_fallthru
        _
    $region6: #{tpu_custom_call.1} parent=1 // loop_footer
      %s40 = sadd.s32 1, %s36
    $region7: #{tpu_custom_call.1} parent=1 // loop_footer_branch
      %35 = sbr.rel target = $region3
    $region8: #{tpu_custom_call.1} parent=1 // loop_exit
      _
    %670 = vsyncpa [#allocation6], 1
    %s671 = scalar_lea.sflag [#allocation6], 1
    %672 = vsyncpa %s671, 1
    %673 = vsyncpa [#allocation9], 1
    %s674 = scalar_lea.sflag [#allocation9], 1
    %675 = vsyncpa %s674, 1
    %676 = vsyncpa [#allocation12], 1
    %s677 = scalar_lea.sflag [#allocation12], 1
    %678 = vsyncpa %s677, 1
    %679 = vsyncpa [#allocation7], 1
    %s680 = scalar_lea.sflag [#allocation7], 1
    %681 = vsyncpa %s680, 1

</llo_original>
